<compile_context>
chip_gen: v6e
topology: v6e:2x2x1
jax: 0.10.0
libtpu: 0.0.40
codegen_flags: <defaults>
</compile_context>

<pallas_src>
import math
from functools import partial

import jax
import jax.numpy as jnp
from jax.experimental import pallas as pl
from jax.experimental.pallas import tpu as pltpu


def _pe_add_kernel(x_ref, pe_ref, o_ref, *, batch: int):
    # x_ref / o_ref: (tile_s, B*D); pe_ref: (tile_s, D).
    pe = pe_ref[...]
    if batch > 1:
        # Lane-axis repeat (tile_s, D) -> (tile_s, B*D); matches the memory
        # order of x.reshape(S, B*D) where the fused axis is (b, d).
        pe = jnp.tile(pe, (1, batch))
    o_ref[...] = x_ref[...] + pe


def make_positional_encoding(d_model: int, max_len: int = 5000) -> jnp.ndarray:
    """(max_len, d_model) sinusoidal table, matching the PyTorch module."""
    position = jnp.arange(0, max_len, dtype=jnp.float32)[:, None]            # (max_len, 1)
    div_term = jnp.exp(
        jnp.arange(0, d_model, 2, dtype=jnp.float32) * (-math.log(10000.0) / d_model)
    )                                                                         # (ceil(d/2),)
    ang = position * div_term                                                 # (max_len, ceil(d/2))
    pe = jnp.zeros((max_len, d_model), dtype=jnp.float32)
    pe = pe.at[:, 0::2].set(jnp.sin(ang))
    pe = pe.at[:, 1::2].set(jnp.cos(ang)[:, : d_model // 2])                  # odd-d_model safe
    return pe


_TARGET_BLOCK_BYTES = 4 * 1024 * 1024   # ~4 MiB x/out blocks (v6e/v7x sweet spot)
_VMEM_LIMIT_BYTES = 48 * 1024 * 1024    # 2 in + 2 out + 2 pe buffers, v7x-safe (<64 MiB)


def _choose_tile_s(S: int, row_bytes: int, block_bytes: int) -> int:
    """Pick a sublane (S-axis) tile: multiple of 8, >=2 grid steps when possible."""
    tile = max(8, (block_bytes // max(row_bytes, 1)) // 8 * 8)
    if tile >= S:
        if S >= 16:
            # Force >= 2 grid steps: lets DMA of block i+1 overlap the add on
            # block i, and on v7x lets both TensorCores contribute bandwidth.
            tile = max(8, ((pl.cdiv(S, 2) + 7) // 8) * 8)
        else:
            tile = S   # full-extent block (always a legal block_shape)
    return tile


def _pe_add_pallas(x2: jnp.ndarray, pe2: jnp.ndarray, batch: int,
                   block_bytes: int) -> jnp.ndarray:
    """x2: (S, B*D) slab; pe2: (S, D). Returns x2 + tile(pe2, B) along lanes."""
    S, BD = x2.shape
    _, D = pe2.shape
    row_bytes = BD * x2.dtype.itemsize
    tile_s = _choose_tile_s(S, row_bytes, block_bytes)
    grid = (pl.cdiv(S, tile_s),)

    return pl.pallas_call(
        partial(_pe_add_kernel, batch=batch),
        out_shape=jax.ShapeDtypeStruct((S, BD), x2.dtype),
        grid=grid,
        in_specs=[
            pl.BlockSpec((tile_s, BD), lambda i: (i, 0)),   # x rows follow the grid
            pl.BlockSpec((tile_s, D), lambda i: (i, 0)),    # matching pe rows (small)
        ],
        out_specs=pl.BlockSpec((tile_s, BD), lambda i: (i, 0)),
        input_output_aliases={0: 0},                        # donate x's buffer to out
        compiler_params=pltpu.CompilerParams(
            dimension_semantics=("parallel",),              # shard grid across v7x's 2 TCs
            vmem_limit_bytes=_VMEM_LIMIT_BYTES),
    )(x2, pe2)


@partial(jax.jit, static_argnames=("min_bytes_for_pallas", "block_bytes"))
def positional_encoding_forward(
    x: jnp.ndarray,
    pe_table: jnp.ndarray,
    *,
    min_bytes_for_pallas: int = 1 << 20,
    block_bytes: int = _TARGET_BLOCK_BYTES,
) -> jnp.ndarray:
    """x: (S, B, D); pe_table: (max_len, D). Returns x + pe[:S][:, None, :]."""
    S, B, D = x.shape
    pe_slice = pe_table[:S, :].astype(x.dtype)           # static slice (plain JAX glue)

    # Tiny problems: kernel launch / per-step overhead dwarfs the ~KiB of work,
    # so let XLA fuse the elementwise add instead of calling Pallas.
    if x.size * x.dtype.itemsize < min_bytes_for_pallas:
        return x + pe_slice[:, None, :]

    # Transpose-free lane-dense view: (S, B, D) -> (S, B*D) is a free reshape
    # (trailing dims collapse, no data movement). pe stays (S, D) and is
    # replicated across B inside the kernel.
    x2 = x.reshape(S, B * D)
    out2 = _pe_add_pallas(x2, pe_slice, B, block_bytes)
    return out2.reshape(S, B, D)


if __name__ == "__main__":
    key = jax.random.PRNGKey(0)
    k0, k1 = jax.random.split(key)

    # Shapes consistent with the module's seq-first forward: S=8, B=2, D=32.
    S, B, D = 8, 2, 32
    MAX_LEN = 64  # semantics identical to max_len=5000 for S <= 64
    x = jax.random.normal(k0, (S, B, D), dtype=jnp.float32)
    pe_table = make_positional_encoding(D, max_len=MAX_LEN)

    # Force the Pallas path even at this tiny size (default policy would use the
    # fused XLA add below 1 MiB).
    out = positional_encoding_forward(x, pe_table, min_bytes_for_pallas=0)
    out = jax.block_until_ready(out)

    ref = x + pe_table[:S, :][:, None, :]
    assert out.shape == x.shape and out.dtype == x.dtype
    assert jnp.allclose(out, ref, atol=1e-6, rtol=1e-6)

    # Second check exercising a multi-block (double-buffered, multi-step) grid:
    # S=32, B*D=128 -> row_bytes=512; block_bytes=4096 -> tile_s=8, grid=(4,).
    S2, B2, D2 = 32, 2, 64
    x_b = jax.random.normal(k1, (S2, B2, D2), dtype=jnp.float32)
    pe_table2 = make_positional_encoding(D2, max_len=MAX_LEN)
    out_b = positional_encoding_forward(
        x_b, pe_table2, min_bytes_for_pallas=0, block_bytes=4096)
    out_b = jax.block_until_ready(out_b)
    ref_b = x_b + pe_table2[:S2, :][:, None, :]
    assert jnp.allclose(out_b, ref_b, atol=1e-6, rtol=1e-6)

    print("KERNEL_OK")
</pallas_src>

<mosaic_0001>
module attributes {stable_mosaic.version = 11 : i64} {
  func.func @_pe_add_kernel(%arg0: i32, %arg1: memref<8x64xf32, #tpu.memory_space<vmem>>, %arg2: memref<8x32xf32, #tpu.memory_space<vmem>>, %arg3: memref<8x64xf32, #tpu.memory_space<vmem>>) attributes {dimension_semantics = [#tpu.dimension_semantics<parallel>], iteration_bounds = array<i64: 1>, scalar_prefetch = 0 : i64, scratch_operands = 0 : i64, tpu.core_type = #tpu.core_type<tc>, window_params = [{transform_indices = @transform_0, window_bounds = array<i64: 8, 64>}, {transform_indices = @transform_1, window_bounds = array<i64: 8, 32>}, {transform_indices = @transform_2, window_bounds = array<i64: 8, 64>}]} {
    %c0 = arith.constant 0 : index
    %c0_0 = arith.constant 0 : index
    %0 = vector.load %arg2[%c0, %c0_0] : memref<8x32xf32, #tpu.memory_space<vmem>>, vector<8x32xf32>
    %1 = tpu.concatenate %0, %0 in 1 : vector<8x32xf32>, vector<8x32xf32> -> vector<8x64xf32>
    %c0_1 = arith.constant 0 : index
    %c0_2 = arith.constant 0 : index
    %2 = vector.load %arg1[%c0_1, %c0_2] : memref<8x64xf32, #tpu.memory_space<vmem>>, vector<8x64xf32>
    %3 = arith.addf %2, %1 : vector<8x64xf32>
    %c0_3 = arith.constant 0 : index
    %c0_4 = arith.constant 0 : index
    %4 = vector.load %arg3[%c0_3, %c0_4] : memref<8x64xf32, #tpu.memory_space<vmem>>, vector<8x64xf32>
    tpu.vector_store %arg3[%c0_3, %c0_4], %3 {strides = array<i32>} : memref<8x64xf32, #tpu.memory_space<vmem>>, vector<8x64xf32>,
    return
  }
  func.func @transform_0(%arg0: i32) -> (i32, i32) {
    %c0_i32 = arith.constant 0 : i32
    %c0_i32_0 = arith.constant 0 : i32
    return %arg0, %c0_i32 : i32, i32
  }
  func.func @transform_1(%arg0: i32) -> (i32, i32) {
    %c0_i32 = arith.constant 0 : i32
    %c0_i32_0 = arith.constant 0 : i32
    return %arg0, %c0_i32 : i32, i32
  }
  func.func @transform_2(%arg0: i32) -> (i32, i32) {
    %c0_i32 = arith.constant 0 : i32
    %c0_i32_0 = arith.constant 0 : i32
    return %arg0, %c0_i32 : i32, i32
  }
}

</mosaic_0001>

<llo_original>
// kernel: positional_encoding_forward.1
$region0: #{positional_encoding_forward.1}
  #allocation0 [shape = 'u32[]', space=smem, size = 0x4, offset = 0x4, fixed_abs, tag = 'smem constant byte address 0x4 - core index']
  #allocation1 [shape = 'u32[144,128]{1,0:T(1,128)}', space=vmem, size = 0x12000, scoped, tag = 'internal scratch']
  %s0 = inlined_call_operand.vmem [shape: f32[8,64], index: 0, kind: input, shape index: {}, may-alias: {0,2}]
  %s1 = inlined_call_operand.vmem [shape: f32[8,32], index: 1, kind: input, shape index: {}]
  %s2 = inlined_call_operand.vmem [shape: f32[8,64], index: 2, kind: output, shape index: {}, may-alias: {0,2}]
  %s3 = sld [smem:[#allocation0]]
  $region18: #{positional_encoding_forward.1} parent=0
    _
  %s5 = ssub.s32 1, %s3
  %s6 = scalar_select 0, %s5, %s3
  // Predicated region
  $region2: #{positional_encoding_forward.1} parent=0 // pred_check
    _
  $region3: #{positional_encoding_forward.1} parent=0 // pred_check_branch
    %8 = sbr.rel (0) target = $region5
  $region4: #{positional_encoding_forward.1} parent=0 // pred_region
    _
  $region5: #{positional_encoding_forward.1} parent=0 // pred_fallthru
    _
  // Predicated region
  $region6: #{positional_encoding_forward.1} parent=0 // pred_check
    _
  $region7: #{positional_encoding_forward.1} parent=0 // pred_check_branch
    %10 = sbr.rel (0) target = $region9
  $region8: #{positional_encoding_forward.1} parent=0 // pred_region
    _
  $region9: #{positional_encoding_forward.1} parent=0 // pred_fallthru
    _
  %v11 = vld [vmem:[%s1] sm:$0xff]
  %13 = vrot.lane.b32.xlu0 %v11, 32
  %v14 = vpop.permute.xlu0 %13
  %vm16 = vcmask 261120
  %v17 = vsel %vm16, %v11, %v14
  %v18 = vld [vmem:[%s0] sm:$0xff]
  %v19 = vadd.f32 %v18, %v17
  %vm20 = vcmask 523264
  %21 = vst.msk [vmem:[%s2] sm:$0xff] %vm20, %v19
  // Predicated region
  $region10: #{positional_encoding_forward.1} parent=0 // pred_check
    _
  $region11: #{positional_encoding_forward.1} parent=0 // pred_check_branch
    %23 = sbr.rel (0) target = $region13
  $region12: #{positional_encoding_forward.1} parent=0 // pred_region
    _
  $region13: #{positional_encoding_forward.1} parent=0 // pred_fallthru
    _
  // Predicated region
  $region14: #{positional_encoding_forward.1} parent=0 // pred_check
    _
  $region15: #{positional_encoding_forward.1} parent=0 // pred_check_branch
    %25 = sbr.rel (0) target = $region17
  $region16: #{positional_encoding_forward.1} parent=0 // pred_region
    _
  $region17: #{positional_encoding_forward.1} parent=0 // pred_fallthru
    _

</llo_original>
